<compile_context>
chip_gen: v7x
topology: tpu7x:2x2x1
jax: 0.10.0
libtpu: 0.0.40
codegen_flags: <defaults>
</compile_context>

<pallas_src>
import jax
import jax.numpy as jnp
from jax.experimental import pallas as pl
from jax.experimental.pallas import tpu as pltpu

_MIB = 1024 * 1024


def _round_up(n, m):
    return ((n + m - 1) // m) * m


def _vmem_capacity_bytes():
    """Per-TensorCore VMEM capacity (64 MiB on v7x, 128 MiB on v5e/v6e)."""
    try:
        return int(pltpu.get_tpu_info().vmem_capacity_bytes)
    except Exception:
        return 128 * _MIB


def _choose_config(rows, D, F, x_bytes, out_bytes, mxu_bytes):
    """Generation/VMEM-aware (tm, tf, vmem_limit_bytes)."""
    cap = _vmem_capacity_bytes()
    if cap <= 96 * _MIB:                       # v7x-class: 64 MiB per TC
        vmem_limit = 56 * _MIB
        tm_desired, tf_desired = 512, 512
    else:                                      # v5e / v6e-class: 128 MiB
        vmem_limit = 100 * _MIB
        tm_desired = 1024 if D <= 1024 else 512
        tf_desired = 1024
    budget = vmem_limit - 6 * _MIB             # headroom: params + compiler scratch

    # d_ff tile: double-buffered w1 (D,tf) + w2 (tf,D) chunks <= ~1/3 of budget.
    w_bytes_per_tf = 4 * D * mxu_bytes
    tf_cap = ((budget // 3) // w_bytes_per_tf // 128) * 128
    tf = max(128, min(tf_desired, tf_cap))
    if F <= tf:
        tf = F                                  # single F-chunk, no weight padding

    # Row tile: spend the remaining budget.
    # Per row of a tile: x (2 bufs) + out (2 bufs) + xn scratch + f32 acc.
    row_bytes = D * (2 * x_bytes + 2 * out_bytes + mxu_bytes + 4)
    remaining = budget - 4 * D * tf * mxu_bytes
    tm_cap = max(16, remaining // row_bytes)
    tm = min(tm_desired, tm_cap, _round_up(rows, 16))
    # Keep both v7x TensorCores busy: >= 2 iterations on the parallel row axis.
    if rows >= 512 and pl.cdiv(rows, tm) < 2:
        tm = min(tm, _round_up(pl.cdiv(rows, 2), 256))
    # MXU-friendly rounding (256-wide systolic M on v6e/v7x; 16 for bf16 sublanes).
    tm = (tm // 256) * 256 if tm >= 256 else max(16, (tm // 16) * 16)
    return int(tm), int(tf), int(vmem_limit)


def ffn_kernel(x_ref, g_ref, bln_ref, w1_ref, b1_ref, w2_ref, b2_ref, o_ref,
               xn_ref, acc_ref):
    fk = pl.program_id(1)

    # First F-chunk of this row tile: LayerNorm once, cache xn (MXU dtype),
    # and fold the output bias + residual into the accumulator init.
    @pl.when(fk == 0)
    def _():
        x = x_ref[...].astype(jnp.float32)                       # (tm, D)
        mean = jnp.mean(x, axis=-1, keepdims=True)
        centered = x - mean
        var = jnp.mean(centered * centered, axis=-1, keepdims=True)
        xn = centered * jax.lax.rsqrt(var + 1e-6)                # eps = 1e-6 (spec)
        xn = xn * g_ref[...] + bln_ref[...]                      # affine (f32)
        xn_ref[...] = xn.astype(xn_ref.dtype)
        acc_ref[...] = x + b2_ref[...]                           # residual + b2

    # h_k = relu(xn @ w1[:, chunk] + b1[chunk]);  acc += h_k @ w2[chunk, :]
    h = jnp.dot(xn_ref[...], w1_ref[...], preferred_element_type=jnp.float32)
    h = jnp.maximum(h + b1_ref[...], 0.0)
    acc_ref[...] += jnp.dot(h.astype(w2_ref.dtype), w2_ref[...],
                            preferred_element_type=jnp.float32)

    # Last F-chunk: store (bias + residual already folded into acc).
    @pl.when(fk == pl.num_programs(1) - 1)
    def _():
        o_ref[...] = acc_ref[...].astype(o_ref.dtype)


def positionwise_ffn(x, gamma, beta, w1, b1, w2, b2, *,
                     mxu_dtype=jnp.bfloat16, tm=None, tf=None):
    """x: (batch, seq, d_model) -> (batch, seq, d_model).

    Weights are stored (in_features, out_features); PyTorch nn.Linear weights
    (out, in) must be pre-transposed by the caller.  Dropout = eval mode.
    """
    B, S, D = x.shape
    F = w1.shape[1]
    rows = B * S

    x_bytes = jnp.dtype(x.dtype).itemsize
    mxu_bytes = jnp.dtype(mxu_dtype).itemsize
    tm_auto, tf_auto, vmem_limit = _choose_config(rows, D, F,
                                                  x_bytes, x_bytes, mxu_bytes)
    if tm is None:
        tm = tm_auto
    if tf is None:
        tf = tf_auto
    tf = min(tf, F)

    # d_ff padding (only when tf does not divide F): zero columns are inert.
    F_pad = _round_up(F, tf)
    w1c = w1.astype(mxu_dtype)
    w2c = w2.astype(mxu_dtype)
    b1f = b1.astype(jnp.float32)
    if F_pad != F:
        w1c = jnp.pad(w1c, ((0, 0), (0, F_pad - F)))
        b1f = jnp.pad(b1f, ((0, F_pad - F),))
        w2c = jnp.pad(w2c, ((0, F_pad - F), (0, 0)))

    # 2-D params for TPU-friendly broadcasting; elementwise params stay f32.
    gamma2 = gamma.reshape(1, D).astype(jnp.float32)
    beta2 = beta.reshape(1, D).astype(jnp.float32)
    b1_2 = b1f.reshape(1, F_pad)
    b2_2 = b2.reshape(1, D).astype(jnp.float32)

    # No row padding: Pallas masks the ragged final row tile.
    x2 = x.reshape(rows, D)

    grid = (pl.cdiv(rows, tm), F_pad // tf)     # reduction (d_ff) axis last

    out2 = pl.pallas_call(
        ffn_kernel,
        out_shape=jax.ShapeDtypeStruct((rows, D), x.dtype),
        grid_spec=pltpu.PrefetchScalarGridSpec(
            num_scalar_prefetch=0,
            grid=grid,
            in_specs=[
                pl.BlockSpec((tm, D), lambda i, f: (i, 0)),   # x row tile (resident over f)
                pl.BlockSpec((1, D), lambda i, f: (0, 0)),    # LN gamma
                pl.BlockSpec((1, D), lambda i, f: (0, 0)),    # LN beta
                pl.BlockSpec((D, tf), lambda i, f: (0, f)),   # w1 F-chunk
                pl.BlockSpec((1, tf), lambda i, f: (0, f)),   # b1 F-chunk
                pl.BlockSpec((tf, D), lambda i, f: (f, 0)),   # w2 F-chunk
                pl.BlockSpec((1, D), lambda i, f: (0, 0)),    # b2
            ],
            out_specs=pl.BlockSpec((tm, D), lambda i, f: (i, 0)),
            scratch_shapes=[
                pltpu.VMEM((tm, D), mxu_dtype),    # cached LayerNorm output
                pltpu.VMEM((tm, D), jnp.float32),  # f32 acc (bias+residual folded)
            ],
        ),
        compiler_params=pltpu.CompilerParams(
            dimension_semantics=("parallel", "arbitrary"),
            vmem_limit_bytes=vmem_limit,
        ),
    )(x2, gamma2, beta2, w1c, b1_2, w2c, b2_2)

    return out2.reshape(B, S, D)


def _init_params(key, d_model, d_ff):
    """Deterministic init mimicking nn.Linear (uniform +-1/sqrt(fan_in)) and
    nn.LayerNorm (gamma=1, beta=0).  Weights stored as (in, out)."""
    k1, k2, k3, k4 = jax.random.split(key, 4)
    bound1 = 1.0 / (d_model ** 0.5)
    bound2 = 1.0 / (d_ff ** 0.5)
    w1 = jax.random.uniform(k1, (d_model, d_ff), jnp.float32, -bound1, bound1)
    b1 = jax.random.uniform(k2, (d_ff,), jnp.float32, -bound1, bound1)
    w2 = jax.random.uniform(k3, (d_ff, d_model), jnp.float32, -bound2, bound2)
    b2 = jax.random.uniform(k4, (d_model,), jnp.float32, -bound2, bound2)
    gamma = jnp.ones((d_model,), jnp.float32)
    beta = jnp.zeros((d_model,), jnp.float32)
    return gamma, beta, w1, b1, w2, b2


def _reference(x, gamma, beta, w1, b1, w2, b2):
    mean = jnp.mean(x, axis=-1, keepdims=True)
    var = jnp.mean((x - mean) ** 2, axis=-1, keepdims=True)
    xn = (x - mean) / jnp.sqrt(var + 1e-6) * gamma + beta
    h = jnp.maximum(xn @ w1 + b1, 0.0)
    return h @ w2 + b2 + x


if __name__ == "__main__":
    # --- config 1: small, divisible shapes ---
    batch, seq, d_model, d_ff = 2, 8, 32, 64
    kx, kp = jax.random.split(jax.random.PRNGKey(0))
    x = jax.random.normal(kx, (batch, seq, d_model), jnp.float32)
    params = _init_params(kp, d_model, d_ff)
    ref = _reference(x, *params)

    # f32 MXU path: tight tolerance correctness check.
    out_f32 = jax.block_until_ready(
        positionwise_ffn(x, *params, mxu_dtype=jnp.float32))
    assert out_f32.shape == (batch, seq, d_model)
    assert jnp.allclose(out_f32, ref, atol=1e-4, rtol=1e-4)

    # Default bf16 MXU path (production perf path): loose tolerance.
    out_bf16 = jax.block_until_ready(positionwise_ffn(x, *params))
    assert out_bf16.shape == (batch, seq, d_model)
    assert jnp.allclose(out_bf16, ref, atol=5e-2, rtol=5e-2)

    # --- config 2: ragged rows (masked final row tile) + non-divisible d_ff
    #     (zero-padded weight chunks) ---
    batch2, seq2, d_model2, d_ff2 = 2, 13, 32, 1152
    kx2, kp2 = jax.random.split(jax.random.PRNGKey(1))
    x2 = jax.random.normal(kx2, (batch2, seq2, d_model2), jnp.float32)
    params2 = _init_params(kp2, d_model2, d_ff2)
    ref2 = _reference(x2, *params2)
    out2 = jax.block_until_ready(
        positionwise_ffn(x2, *params2, mxu_dtype=jnp.float32))
    assert out2.shape == (batch2, seq2, d_model2)
    assert jnp.allclose(out2, ref2, atol=1e-4, rtol=1e-4)

    print("KERNEL_OK")
</pallas_src>

<mosaic_0001>
module attributes {stable_mosaic.version = 11 : i64} {
  func.func @ffn_kernel(%arg0: i32, %arg1: i32, %arg2: memref<16x32xf32, #tpu.memory_space<vmem>>, %arg3: memref<1x32xf32, #tpu.memory_space<vmem>>, %arg4: memref<1x32xf32, #tpu.memory_space<vmem>>, %arg5: memref<32x64xf32, #tpu.memory_space<vmem>>, %arg6: memref<1x64xf32, #tpu.memory_space<vmem>>, %arg7: memref<64x32xf32, #tpu.memory_space<vmem>>, %arg8: memref<1x32xf32, #tpu.memory_space<vmem>>, %arg9: memref<16x32xf32, #tpu.memory_space<vmem>>, %arg10: memref<16x32xf32, #tpu.memory_space<vmem>>, %arg11: memref<16x32xf32, #tpu.memory_space<vmem>>) attributes {dimension_semantics = [#tpu.dimension_semantics<parallel>, #tpu.dimension_semantics<arbitrary>], iteration_bounds = array<i64: 1, 1>, scalar_prefetch = 0 : i64, scratch_operands = 2 : i64, tpu.core_type = #tpu.core_type<tc>, window_params = [{transform_indices = @transform_0, window_bounds = array<i64: 16, 32>}, {pipeline_mode = #tpu.pipeline_mode<synchronous>, transform_indices = @transform_1, window_bounds = array<i64: 1, 32>}, {pipeline_mode = #tpu.pipeline_mode<synchronous>, transform_indices = @transform_2, window_bounds = array<i64: 1, 32>}, {transform_indices = @transform_3, window_bounds = array<i64: 32, 64>}, {transform_indices = @transform_4, window_bounds = array<i64: 1, 64>}, {transform_indices = @transform_5, window_bounds = array<i64: 64, 32>}, {pipeline_mode = #tpu.pipeline_mode<synchronous>, transform_indices = @transform_6, window_bounds = array<i64: 1, 32>}, {transform_indices = @transform_7, window_bounds = array<i64: 16, 32>}]} {
    %c0_i32 = arith.constant 0 : i32
    %0 = arith.cmpi eq, %arg1, %c0_i32 : i32
    %1 = arith.extui %0 : i1 to i32
    %c0_i32_0 = arith.constant 0 : i32
    %2 = arith.cmpi ne, %1, %c0_i32_0 : i32
    scf.if %2 {
      %c0_16 = arith.constant 0 : index
      %c0_17 = arith.constant 0 : index
      %19 = vector.load %arg2[%c0_16, %c0_17] : memref<16x32xf32, #tpu.memory_space<vmem>>, vector<16x32xf32>
      %cst_18 = arith.constant dense<0.000000e+00> : vector<16xf32>
      %20 = vector.multi_reduction <add>, %19, %cst_18 [1] : vector<16x32xf32> to vector<16xf32>
      %21 = vector.shape_cast %20 : vector<16xf32> to vector<16x1xf32>
      %cst_19 = arith.constant 3.200000e+01 : f32
      %22 = vector.broadcast %cst_19 : f32 to vector<16x1xf32>
      %23 = arith.divf %21, %22 : vector<16x1xf32>
      %24 = vector.broadcast %23 : vector<16x1xf32> to vector<16x32xf32>
      %25 = arith.subf %19, %24 : vector<16x32xf32>
      %26 = arith.mulf %25, %25 : vector<16x32xf32>
      %cst_20 = arith.constant dense<0.000000e+00> : vector<16xf32>
      %27 = vector.multi_reduction <add>, %26, %cst_20 [1] : vector<16x32xf32> to vector<16xf32>
      %28 = vector.shape_cast %27 : vector<16xf32> to vector<16x1xf32>
      %cst_21 = arith.constant 3.200000e+01 : f32
      %29 = vector.broadcast %cst_21 : f32 to vector<16x1xf32>
      %30 = arith.divf %28, %29 : vector<16x1xf32>
      %cst_22 = arith.constant 9.99999997E-7 : f32
      %31 = vector.broadcast %cst_22 : f32 to vector<16x1xf32>
      %32 = arith.addf %30, %31 : vector<16x1xf32>
      %33 = math.rsqrt %32 : vector<16x1xf32>
      %34 = vector.broadcast %33 : vector<16x1xf32> to vector<16x32xf32>
      %35 = arith.mulf %25, %34 : vector<16x32xf32>
      %c0_23 = arith.constant 0 : index
      %c0_24 = arith.constant 0 : index
      %36 = vector.load %arg3[%c0_23, %c0_24] : memref<1x32xf32, #tpu.memory_space<vmem>>, vector<1x32xf32>
      %37 = vector.broadcast %36 : vector<1x32xf32> to vector<16x32xf32>
      %38 = arith.mulf %35, %37 : vector<16x32xf32>
      %c0_25 = arith.constant 0 : index
      %c0_26 = arith.constant 0 : index
      %39 = vector.load %arg4[%c0_25, %c0_26] : memref<1x32xf32, #tpu.memory_space<vmem>>, vector<1x32xf32>
      %40 = vector.broadcast %39 : vector<1x32xf32> to vector<16x32xf32>
      %41 = arith.addf %38, %40 : vector<16x32xf32>
      %c0_27 = arith.constant 0 : index
      %c0_28 = arith.constant 0 : index
      %42 = vector.load %arg10[%c0_27, %c0_28] : memref<16x32xf32, #tpu.memory_space<vmem>>, vector<16x32xf32>
      tpu.vector_store %arg10[%c0_27, %c0_28], %41 {strides = array<i32>} : memref<16x32xf32, #tpu.memory_space<vmem>>, vector<16x32xf32>,
      %c0_29 = arith.constant 0 : index
      %c0_30 = arith.constant 0 : index
      %43 = vector.load %arg8[%c0_29, %c0_30] : memref<1x32xf32, #tpu.memory_space<vmem>>, vector<1x32xf32>
      %44 = vector.broadcast %43 : vector<1x32xf32> to vector<16x32xf32>
      %45 = arith.addf %19, %44 : vector<16x32xf32>
      %c0_31 = arith.constant 0 : index
      %c0_32 = arith.constant 0 : index
      %46 = vector.load %arg11[%c0_31, %c0_32] : memref<16x32xf32, #tpu.memory_space<vmem>>, vector<16x32xf32>
      tpu.vector_store %arg11[%c0_31, %c0_32], %45 {strides = array<i32>} : memref<16x32xf32, #tpu.memory_space<vmem>>, vector<16x32xf32>,
    } else {
    }
    %c0 = arith.constant 0 : index
    %c0_1 = arith.constant 0 : index
    %3 = vector.load %arg10[%c0, %c0_1] : memref<16x32xf32, #tpu.memory_space<vmem>>, vector<16x32xf32>
    %c0_2 = arith.constant 0 : index
    %c0_3 = arith.constant 0 : index
    %4 = vector.load %arg5[%c0_2, %c0_3] : memref<32x64xf32, #tpu.memory_space<vmem>>, vector<32x64xf32>
    %cst = arith.constant dense<0.000000e+00> : vector<16x64xf32>
    %5 = tpu.matmul %3, %4, %cst {dimension_numbers = #tpu.dot_dimension_numbers<[1], [0], [0], [1], [0, 0, 1, 1], [], []>} : vector<16x32xf32>, vector<32x64xf32>, vector<16x64xf32> -> vector<16x64xf32>
    %c0_4 = arith.constant 0 : index
    %c0_5 = arith.constant 0 : index
    %6 = vector.load %arg6[%c0_4, %c0_5] : memref<1x64xf32, #tpu.memory_space<vmem>>, vector<1x64xf32>
    %7 = vector.broadcast %6 : vector<1x64xf32> to vector<16x64xf32>
    %8 = arith.addf %5, %7 : vector<16x64xf32>
    %cst_6 = arith.constant 0.000000e+00 : f32
    %9 = vector.broadcast %cst_6 : f32 to vector<16x64xf32>
    %10 = arith.maximumf %8, %9 : vector<16x64xf32>
    %c0_7 = arith.constant 0 : index
    %c0_8 = arith.constant 0 : index
    %11 = vector.load %arg11[%c0_7, %c0_8] : memref<16x32xf32, #tpu.memory_space<vmem>>, vector<16x32xf32>
    %c0_9 = arith.constant 0 : index
    %c0_10 = arith.constant 0 : index
    %12 = vector.load %arg7[%c0_9, %c0_10] : memref<64x32xf32, #tpu.memory_space<vmem>>, vector<64x32xf32>
    %cst_11 = arith.constant dense<0.000000e+00> : vector<16x32xf32>
    %13 = tpu.matmul %10, %12, %cst_11 {dimension_numbers = #tpu.dot_dimension_numbers<[1], [0], [0], [1], [0, 0, 1, 1], [], []>} : vector<16x64xf32>, vector<64x32xf32>, vector<16x32xf32> -> vector<16x32xf32>
    %14 = arith.addf %11, %13 : vector<16x32xf32>
    %c0_12 = arith.constant 0 : index
    %c0_13 = arith.constant 0 : index
    %15 = vector.load %arg11[%c0_12, %c0_13] : memref<16x32xf32, #tpu.memory_space<vmem>>, vector<16x32xf32>
    tpu.vector_store %arg11[%c0_12, %c0_13], %14 {strides = array<i32>} : memref<16x32xf32, #tpu.memory_space<vmem>>, vector<16x32xf32>,
    %c0_i32_14 = arith.constant 0 : i32
    %16 = arith.cmpi eq, %arg1, %c0_i32_14 : i32
    %17 = arith.extui %16 : i1 to i32
    %c0_i32_15 = arith.constant 0 : i32
    %18 = arith.cmpi ne, %17, %c0_i32_15 : i32
    scf.if %18 {
      %c0_16 = arith.constant 0 : index
      %c0_17 = arith.constant 0 : index
      %19 = vector.load %arg11[%c0_16, %c0_17] : memref<16x32xf32, #tpu.memory_space<vmem>>, vector<16x32xf32>
      %c0_18 = arith.constant 0 : index
      %c0_19 = arith.constant 0 : index
      %20 = vector.load %arg9[%c0_18, %c0_19] : memref<16x32xf32, #tpu.memory_space<vmem>>, vector<16x32xf32>
      tpu.vector_store %arg9[%c0_18, %c0_19], %19 {strides = array<i32>} : memref<16x32xf32, #tpu.memory_space<vmem>>, vector<16x32xf32>,
    } else {
    }
    return
  }
  func.func @transform_0(%arg0: i32, %arg1: i32) -> (i32, i32) {
    %c0_i32 = arith.constant 0 : i32
    %c0_i32_0 = arith.constant 0 : i32
    return %arg0, %c0_i32 : i32, i32
  }
  func.func @transform_1(%arg0: i32, %arg1: i32) -> (i32, i32) {
    %c0_i32 = arith.constant 0 : i32
    %c0_i32_0 = arith.constant 0 : i32
    %c0_i32_1 = arith.constant 0 : i32
    return %c0_i32, %c0_i32_0 : i32, i32
  }
  func.func @transform_2(%arg0: i32, %arg1: i32) -> (i32, i32) {
    %c0_i32 = arith.constant 0 : i32
    %c0_i32_0 = arith.constant 0 : i32
    %c0_i32_1 = arith.constant 0 : i32
    return %c0_i32, %c0_i32_0 : i32, i32
  }
  func.func @transform_3(%arg0: i32, %arg1: i32) -> (i32, i32) {
    %c0_i32 = arith.constant 0 : i32
    %c0_i32_0 = arith.constant 0 : i32
    return %c0_i32, %arg1 : i32, i32
  }
  func.func @transform_4(%arg0: i32, %arg1: i32) -> (i32, i32) {
    %c0_i32 = arith.constant 0 : i32
    %c0_i32_0 = arith.constant 0 : i32
    return %c0_i32, %arg1 : i32, i32
  }
  func.func @transform_5(%arg0: i32, %arg1: i32) -> (i32, i32) {
    %c0_i32 = arith.constant 0 : i32
    %c0_i32_0 = arith.constant 0 : i32
    return %arg1, %c0_i32 : i32, i32
  }
  func.func @transform_6(%arg0: i32, %arg1: i32) -> (i32, i32) {
    %c0_i32 = arith.constant 0 : i32
    %c0_i32_0 = arith.constant 0 : i32
    %c0_i32_1 = arith.constant 0 : i32
    return %c0_i32, %c0_i32_0 : i32, i32
  }
  func.func @transform_7(%arg0: i32, %arg1: i32) -> (i32, i32) {
    %c0_i32 = arith.constant 0 : i32
    %c0_i32_0 = arith.constant 0 : i32
    return %arg0, %c0_i32 : i32, i32
  }
}

</mosaic_0001>

<llo_original>
// kernel: tpu_custom_call.1
$region0: #{tpu_custom_call.1}
  #allocation0 [shape = 'u32[]', space=smem, size = 0x4, offset = 0x4, fixed_abs, tag = 'smem constant byte address 0x4 - core index']
  #allocation1 [shape = 'u32[144,128]{1,0:T(1,128)}', space=vmem, size = 0x12000, scoped, tag = 'internal scratch']
  #allocation2 [shape = 'f32[16,32]{1,0:T(8,128)}', space=vmem, size = 0x2000, scoped, tag = 'scratch operand']
  #allocation3 [shape = 'f32[16,32]{1,0:T(8,128)}', space=vmem, size = 0x2000, scoped, tag = 'scratch operand']
  %s0 = inlined_call_operand.hbm [shape: f32[16,32], index: 0, kind: input, shape index: {}]
  %s1 = inlined_call_operand.hbm [shape: f32[1,32], index: 1, kind: input, shape index: {}]
  %s2 = inlined_call_operand.hbm [shape: f32[1,32], index: 2, kind: input, shape index: {}]
  %s3 = inlined_call_operand.hbm [shape: f32[32,64], index: 3, kind: input, shape index: {}]
  %s4 = inlined_call_operand.hbm [shape: f32[1,64], index: 4, kind: input, shape index: {}]
  %s5 = inlined_call_operand.hbm [shape: f32[64,32], index: 5, kind: input, shape index: {}]
  %s6 = inlined_call_operand.hbm [shape: f32[1,32], index: 6, kind: input, shape index: {}]
  %s7 = inlined_call_operand.hbm [shape: f32[16,32], index: 7, kind: output, shape index: {}]
  %s8 = sld [smem:[#allocation0]]
  $region74: #{tpu_custom_call.1} parent=0
    _
  %s10 = ssub.s32 1, %s8
  %s11 = scalar_select 0, %s10, %s8
  $region1: #{tpu_custom_call.1} parent=0
    #allocation4 [shape = 'u8[8192]{0}', space=vmem, size = 0x2000, scoped, tag = 'input window, operand 0, single buffered']
    #allocation5 [shape = 's32[1]{0}', space=sflag, size = 0x4, scoped, tag = 'scoped memory for tpu_custom_call.1']
    #allocation6 [shape = 's32[1]{0}', space=sflag, size = 0x4, scoped, tag = 'scoped memory for tpu_custom_call.1']
    #allocation7 [shape = 'u8[512]{0}', space=vmem, size = 0x400, scoped, tag = 'input window, operand 1, single buffered']
    #allocation8 [shape = 's32[1]{0}', space=sflag, size = 0x4, scoped, tag = 'scoped memory for tpu_custom_call.1']
    #allocation9 [shape = 'u8[512]{0}', space=vmem, size = 0x400, scoped, tag = 'input window, operand 2, single buffered']
    #allocation10 [shape = 'u8[16384]{0}', space=vmem, size = 0x4000, scoped, tag = 'input window, operand 3, single buffered']
    #allocation11 [shape = 's32[1]{0}', space=sflag, size = 0x4, scoped, tag = 'scoped memory for tpu_custom_call.1']
    #allocation12 [shape = 'u8[512]{0}', space=vmem, size = 0x400, scoped, tag = 'input window, operand 4, single buffered']
    #allocation13 [shape = 'u8[32768]{0}', space=vmem, size = 0x8000, scoped, tag = 'input window, operand 5, single buffered']
    #allocation14 [shape = 's32[1]{0}', space=sflag, size = 0x4, scoped, tag = 'scoped memory for tpu_custom_call.1']
    #allocation15 [shape = 'u8[512]{0}', space=vmem, size = 0x400, scoped, tag = 'input window, operand 6, single buffered']
    #allocation16 [shape = 'u8[8192]{0}', space=vmem, size = 0x2000, scoped, tag = 'output window, operand 0, single buffered']
    %12 = vsyncpa [#allocation5], 0
    %13 = vsyncpa [#allocation8], 0
    %14 = vsyncpa [#allocation11], 0
    %15 = vsyncpa [#allocation14], 0
    %16 = vsyncpa [#allocation6], 0
    // Predicated region
    $region2: #{tpu_custom_call.1} parent=1 // pred_check
      _
    $region3: #{tpu_custom_call.1} parent=1 // pred_check_branch
      %18 = sbr.rel (0) target = $region5
    $region4: #{tpu_custom_call.1} parent=1 // pred_region
      %s20 = ssub.s32 256, 256
      %21 = vsyncadd [#allocation5], %s20
      %s22 = sshll.u32 [#allocation4], 4
      %s23 = int_to_ptr.vmem [resolvable:$true] %s22
      %28 = dma.hbm_to_vmem [thread:$0]  %s0, 256, %s23, [#allocation5], 128, 128, 8
    $region5: #{tpu_custom_call.1} parent=1 // pred_fallthru
      _
    // Predicated region
    $region6: #{tpu_custom_call.1} parent=1 // pred_check
      _
    $region7: #{tpu_custom_call.1} parent=1 // pred_check_branch
      %30 = sbr.rel (0) target = $region9
    $region8: #{tpu_custom_call.1} parent=1 // pred_region
      %s32 = ssub.s32 16, 16
      %33 = vsyncadd [#allocation8], %s32
      %s35 = sshll.u32 [#allocation7], 4
      %s36 = int_to_ptr.vmem [resolvable:$true] %s35
      %38 = dma.hbm_to_vmem [thread:$0]  %s1, 16, %s36, [#allocation8]
    $region9: #{tpu_custom_call.1} parent=1 // pred_fallthru
      _
    // Predicated region
    $region10: #{tpu_custom_call.1} parent=1 // pred_check
      _
    $region11: #{tpu_custom_call.1} parent=1 // pred_check_branch
      %40 = sbr.rel (0) target = $region13
    $region12: #{tpu_custom_call.1} parent=1 // pred_region
      %s42 = ssub.s32 16, 16
      %43 = vsyncadd [#allocation8], %s42
      %s45 = sshll.u32 [#allocation9], 4
      %s46 = int_to_ptr.vmem [resolvable:$true] %s45
      %48 = dma.hbm_to_vmem [thread:$0]  %s2, 16, %s46, [#allocation8]
    $region13: #{tpu_custom_call.1} parent=1 // pred_fallthru
      _
    // Predicated region
    $region14: #{tpu_custom_call.1} parent=1 // pred_check
      _
    $region15: #{tpu_custom_call.1} parent=1 // pred_check_branch
      %50 = sbr.rel (0) target = $region17
    $region16: #{tpu_custom_call.1} parent=1 // pred_region
      %s52 = ssub.s32 512, 512
      %53 = vsyncadd [#allocation11], %s52
      %s54 = sshll.u32 [#allocation10], 4
      %s55 = int_to_ptr.vmem [resolvable:$true] %s54
      %60 = dma.hbm_to_vmem [thread:$0]  %s3, 512, %s55, [#allocation11], 128, 128, 8
    $region17: #{tpu_custom_call.1} parent=1 // pred_fallthru
      _
    // Predicated region
    $region18: #{tpu_custom_call.1} parent=1 // pred_check
      _
    $region19: #{tpu_custom_call.1} parent=1 // pred_check_branch
      %62 = sbr.rel (0) target = $region21
    $region20: #{tpu_custom_call.1} parent=1 // pred_region
      %s64 = ssub.s32 16, 16
      %65 = vsyncadd [#allocation11], %s64
      %s67 = sshll.u32 [#allocation12], 4
      %s68 = int_to_ptr.vmem [resolvable:$true] %s67
      %70 = dma.hbm_to_vmem [thread:$0]  %s4, 16, %s68, [#allocation11]
    $region21: #{tpu_custom_call.1} parent=1 // pred_fallthru
      _
    // Predicated region
    $region22: #{tpu_custom_call.1} parent=1 // pred_check
      _
    $region23: #{tpu_custom_call.1} parent=1 // pred_check_branch
      %72 = sbr.rel (0) target = $region25
    $region24: #{tpu_custom_call.1} parent=1 // pred_region
      %s74 = ssub.s32 1024, 1024
      %75 = vsyncadd [#allocation14], %s74
      %s76 = sshll.u32 [#allocation13], 4
      %s77 = int_to_ptr.vmem [resolvable:$true] %s76
      %82 = dma.hbm_to_vmem [thread:$0]  %s5, 1024, %s77, [#allocation14], 128, 128, 8
    $region25: #{tpu_custom_call.1} parent=1 // pred_fallthru
      _
    // Predicated region
    $region26: #{tpu_custom_call.1} parent=1 // pred_check
      _
    $region27: #{tpu_custom_call.1} parent=1 // pred_check_branch
      %84 = sbr.rel (0) target = $region29
    $region28: #{tpu_custom_call.1} parent=1 // pred_region
      %s86 = ssub.s32 16, 16
      %87 = vsyncadd [#allocation14], %s86
      %s89 = sshll.u32 [#allocation15], 4
      %s90 = int_to_ptr.vmem [resolvable:$true] %s89
      %92 = dma.hbm_to_vmem [thread:$0]  %s6, 16, %s90, [#allocation14]
    $region29: #{tpu_custom_call.1} parent=1 // pred_fallthru
      _
    // Predicated region
    $region30: #{tpu_custom_call.1} parent=1 // pred_check
      _
    $region31: #{tpu_custom_call.1} parent=1 // pred_check_branch
      %94 = sbr.rel (0) target = $region33
    $region32: #{tpu_custom_call.1} parent=1 // pred_region
      %95 = dma.done [#allocation5], 256
    $region33: #{tpu_custom_call.1} parent=1 // pred_fallthru
      _
    // Predicated region
    $region34: #{tpu_custom_call.1} parent=1 // pred_check
      _
    $region35: #{tpu_custom_call.1} parent=1 // pred_check_branch
      %97 = sbr.rel (0) target = $region37
    $region36: #{tpu_custom_call.1} parent=1 // pred_region
      %98 = dma.done [#allocation8], 16
    $region37: #{tpu_custom_call.1} parent=1 // pred_fallthru
      _
    // Predicated region
    $region38: #{tpu_custom_call.1} parent=1 // pred_check
      _
    $region39: #{tpu_custom_call.1} parent=1 // pred_check_branch
      %100 = sbr.rel (0) target = $region41
    $region40: #{tpu_custom_call.1} parent=1 // pred_region
      %101 = dma.done [#allocation8], 16
    $region41: #{tpu_custom_call.1} parent=1 // pred_fallthru
      _
    // Predicated region
    $region42: #{tpu_custom_call.1} parent=1 // pred_check
      _
    $region43: #{tpu_custom_call.1} parent=1 // pred_check_branch
      %103 = sbr.rel (0) target = $region45
    $region44: #{tpu_custom_call.1} parent=1 // pred_region
      %104 = dma.done [#allocation11], 512
    $region45: #{tpu_custom_call.1} parent=1 // pred_fallthru
      _
    // Predicated region
    $region46: #{tpu_custom_call.1} parent=1 // pred_check
      _
    $region47: #{tpu_custom_call.1} parent=1 // pred_check_branch
      %106 = sbr.rel (0) target = $region49
    $region48: #{tpu_custom_call.1} parent=1 // pred_region
      %107 = dma.done [#allocation11], 16
    $region49: #{tpu_custom_call.1} parent=1 // pred_fallthru
      _
    // Predicated region
    $region50: #{tpu_custom_call.1} parent=1 // pred_check
      _
    $region51: #{tpu_custom_call.1} parent=1 // pred_check_branch
      %109 = sbr.rel (0) target = $region53
    $region52: #{tpu_custom_call.1} parent=1 // pred_region
      %110 = dma.done [#allocation14], 1024
    $region53: #{tpu_custom_call.1} parent=1 // pred_fallthru
      _
    // Predicated region
    $region54: #{tpu_custom_call.1} parent=1 // pred_check
      _
    $region55: #{tpu_custom_call.1} parent=1 // pred_check_branch
      %112 = sbr.rel (0) target = $region57
    $region56: #{tpu_custom_call.1} parent=1 // pred_region
      %113 = dma.done [#allocation14], 16
    $region57: #{tpu_custom_call.1} parent=1 // pred_fallthru
      _
    %p114 = scmp.eq.s32.totalorder 0, 0
    // Predicated region
    $region58: #{tpu_custom_call.1} parent=1 // pred_check
      %p115 = pneg %p114
    $region59: #{tpu_custom_call.1} parent=1 // pred_check_branch
      %117 = sbr.rel (%p115) target = $region61
    $region60: #{tpu_custom_call.1} parent=1 // pred_region
      %v118 = vld [vmem:[#allocation4] sm:$0xff]
      %v119 = vld [vmem:[#allocation4 + $0x8] sm:$0xff]
      %vm120 = vcmask 261120
      %v121 = vsel %vm120, %v118, 0.0
      %122 = vadd.xlane.f32.xlu0 %v121
      %v123 = vpop.xlane.xlu0 %122
      %v124 = vsel %vm120, %v119, 0.0
      %125 = vadd.xlane.f32.xlu0 %v124
      %v126 = vpop.xlane.xlu0 %125
      %v127 = vrcp.pop 32.0
      %v128 = vmul.f32 %v123, %v127
      %v129 = vmul.f32 %v126, %v127
      %v130 = vsub.f32 %v118, %v128
      %v131 = vsub.f32 %v119, %v129
      %v132 = vmul.f32 %v130, %v130
      %v133 = vmul.f32 %v131, %v131
      %v134 = vsel %vm120, %v132, 0.0
      %135 = vadd.xlane.f32.xlu0 %v134
      %v136 = vpop.xlane.xlu0 %135
      %v137 = vsel %vm120, %v133, 0.0
      %138 = vadd.xlane.f32.xlu0 %v137
      %v139 = vpop.xlane.xlu0 %138
      %v140 = vmul.f32 %v136, %v127
      %v141 = vmul.f32 %v139, %v127
      %v142 = vadd.f32 %v140, 1e-06
      %v143 = vadd.f32 %v141, 1e-06
      %v144 = vrsqrt.pop %v142
      %v145 = vrsqrt.pop %v143
      %v146 = vmul.f32 %v130, %v144
      %v147 = vmul.f32 %v131, %v145
      %v148 = vld [vmem:[#allocation7] sm:$0x1]
      %v150 = vlaneseq
      %v151 = vshrl.u32 %v150, 7
      %v152 = vsub.s32 0, %v151
      %v153 = vrot.slane %v148, %v152
      %v155 = vmul.f32 %v146, %v153
      %v156 = vmul.f32 %v147, %v153
      %v157 = vld [vmem:[#allocation9] sm:$0x1]
      %v159 = vlaneseq
      %v160 = vshrl.u32 %v159, 7
      %v161 = vsub.s32 0, %v160
      %v162 = vrot.slane %v157, %v161
      %v164 = vadd.f32 %v155, %v162
      %v165 = vadd.f32 %v156, %v162
      %166 = vst.msk [vmem:[#allocation2] sm:$0xff] %vm120, %v164
      %167 = vst.msk [vmem:[#allocation2 + $0x8] sm:$0xff] %vm120, %v165
      %v168 = vld [vmem:[#allocation15] sm:$0x1]
      %v170 = vlaneseq
      %v171 = vshrl.u32 %v170, 7
      %v172 = vsub.s32 0, %v171
      %v173 = vrot.slane %v168, %v172
      %v175 = vadd.f32 %v118, %v173
      %v176 = vadd.f32 %v119, %v173
      %177 = vst.msk [vmem:[#allocation3] sm:$0xff] %vm120, %v175
      %178 = vst.msk [vmem:[#allocation3 + $0x8] sm:$0xff] %vm120, %v176
    $region61: #{tpu_custom_call.1} parent=1 // pred_fallthru
      _
    %v179 = vld [vmem:[#allocation2] sm:$0xff]
    %v180 = vld [vmem:[#allocation2 + $0x8] sm:$0xff]
    %v181 = vld [vmem:[#allocation10] sm:$0xff]
    %v182 = vld [vmem:[#allocation10 + $0x8] sm:$0xff]
    %v183 = vld [vmem:[#allocation10 + $0x10] sm:$0xff]
    %v184 = vld [vmem:[#allocation10 + $0x18] sm:$0xff]
    %v185 = vld [vmem:[#allocation12] sm:$0x1]
    %v187 = vlaneseq
    %v188 = vshrl.u32 %v187, 7
    %v189 = vsub.s32 0, %v188
    %v190 = vrot.slane %v185, %v189
    %vm192 = vcmask 261120
    %v194 = vsel %vm192, %v179, 0
    %v197 = vsel %vm192, %v180, 0
    %199 = vmatprep.subr.mxu0 0.0
    %200 = vmatpush1.msra.mxu0 %v181
    %201 = vmatprep.subr.mxu0 0.0
    %202 = vmatpush1.msra.mxu0 %v182
    %203 = vmatprep.subr.mxu0 0.0
    %204 = vmatpush1.msra.mxu0 %v183
    %205 = vmatprep.subr.mxu0 0.0
    %206 = vmatpush1.msra.mxu0 %v184
    %207 = vmatprep.subr.mxu0 0.0
    %208 = vmatpush1.msra.mxu0 0.0
    %209 = vmatprep.subr.mxu0 0.0
    %210 = vmatpush1.msra.mxu0 0.0
    %211 = vmatprep.subr.mxu0 0.0
    %212 = vmatpush1.msra.mxu0 0.0
    %213 = vmatprep.subr.mxu0 0.0
    %214 = vmatpush1.msra.mxu0 0.0
    %215 = vmatprep.subr.mxu0 0.0
    %216 = vmatpush1.msra.mxu0 0.0
    %217 = vmatprep.subr.mxu0 0.0
    %218 = vmatpush1.msra.mxu0 0.0
    %219 = vmatprep.subr.mxu0 0.0
    %220 = vmatpush1.msra.mxu0 0.0
    %221 = vmatprep.subr.mxu0 0.0
    %222 = vmatpush1.msra.mxu0 0.0
    %223 = vmatprep.subr.mxu0 0.0
    %224 = vmatpush1.msra.mxu0 0.0
    %225 = vmatprep.subr.mxu0 0.0
    %226 = vmatpush1.msra.mxu0 0.0
    %227 = vmatprep.subr.mxu0 0.0
    %228 = vmatpush1.msra.mxu0 0.0
    %229 = vmatprep.subr.mxu0 0.0
    %230 = vmatpush1.msra.mxu0 0.0
    %231 = vmatprep.subr.mxu0 0.0
    %232 = vmatpush1.msra.mxu0 0.0
    %233 = vmatprep.subr.mxu0 0.0
    %234 = vmatpush1.msra.mxu0 0.0
    %235 = vmatprep.subr.mxu0 0.0
    %236 = vmatpush1.msra.mxu0 0.0
    %237 = vmatprep.subr.mxu0 0.0
    %238 = vmatpush1.msra.mxu0 0.0
    %239 = vmatprep.subr.mxu0 0.0
    %240 = vmatpush1.msra.mxu0 0.0
    %241 = vmatprep.subr.mxu0 0.0
    %242 = vmatpush1.msra.mxu0 0.0
    %243 = vmatprep.subr.mxu0 0.0
    %244 = vmatpush1.msra.mxu0 0.0
    %245 = vmatprep.subr.mxu0 0.0
    %246 = vmatpush1.msra.mxu0 0.0
    %247 = vmatprep.subr.mxu0 0.0
    %248 = vmatpush1.msra.mxu0 0.0
    %249 = vmatprep.subr.mxu0 0.0
    %250 = vmatpush1.msra.mxu0 0.0
    %251 = vmatprep.subr.mxu0 0.0
    %252 = vmatpush1.msra.mxu0 0.0
    %253 = vmatprep.subr.mxu0 0.0
    %254 = vmatpush1.msra.mxu0 0.0
    %255 = vmatprep.subr.mxu0 0.0
    %256 = vmatpush1.msra.mxu0 0.0
    %257 = vmatprep.subr.mxu0 0.0
    %258 = vmatpush1.msra.mxu0 0.0
    %259 = vmatprep.subr.mxu0 0.0
    %260 = vmatpush1.msra.mxu0 0.0
    %261 = vmatprep.subr.mxu0 0.0
    %262 = vmatpush1.msra.mxu0 0.0
    %263 = vmatprep.mubr.f32.mxu0 0.0
    %264 = vmatmul.mubr.f32.gmra.mrb[0].mxu0 %v194
    %v265 = vpop.f32.mrb[0].mxu0
    %v266 = vadd.f32 %v190, %v265
    %v267 = vpop.f32.mrb[0].mxu0
    %268 = vmatprep.mubr.f32.mxu0 0.0
    %269 = vmatmul.mubr.f32.gmra.mrb[0].mxu0 %v197
    %v270 = vpop.f32.mrb[0].mxu0
    %v271 = vadd.f32 %v190, %v270
    %v272 = vpop.f32.mrb[0].mxu0
    %273 = vdwg.mxu0
    %v274 = vmax.f32 %v266, 0.0
    %v275 = vmax.f32 %v271, 0.0
    %v276 = vld [vmem:[#allocation3] sm:$0xff]
    %v277 = vld [vmem:[#allocation3 + $0x8] sm:$0xff]
    %v278 = vld [vmem:[#allocation13] sm:$0xff]
    %v279 = vld [vmem:[#allocation13 + $0x8] sm:$0xff]
    %v280 = vld [vmem:[#allocation13 + $0x10] sm:$0xff]
    %v281 = vld [vmem:[#allocation13 + $0x18] sm:$0xff]
    %v282 = vld [vmem:[#allocation13 + $0x20] sm:$0xff]
    %v283 = vld [vmem:[#allocation13 + $0x28] sm:$0xff]
    %v284 = vld [vmem:[#allocation13 + $0x30] sm:$0xff]
    %v285 = vld [vmem:[#allocation13 + $0x38] sm:$0xff]
    %vm286 = vcmask 523264
    %v288 = vsel %vm286, %v274, 0
    %v291 = vsel %vm286, %v275, 0
    %293 = vmatprep.subr.mxu0 0.0
    %294 = vmatpush1.msra.mxu0 %v278
    %295 = vmatprep.subr.mxu0 0.0
    %296 = vmatpush1.msra.mxu0 %v279
    %297 = vmatprep.subr.mxu0 0.0
    %298 = vmatpush1.msra.mxu0 %v280
    %299 = vmatprep.subr.mxu0 0.0
    %300 = vmatpush1.msra.mxu0 %v281
    %301 = vmatprep.subr.mxu0 0.0
    %302 = vmatpush1.msra.mxu0 %v282
    %303 = vmatprep.subr.mxu0 0.0
    %304 = vmatpush1.msra.mxu0 %v283
    %305 = vmatprep.subr.mxu0 0.0
    %306 = vmatpush1.msra.mxu0 %v284
    %307 = vmatprep.subr.mxu0 0.0
    %308 = vmatpush1.msra.mxu0 %v285
    %309 = vmatprep.subr.mxu0 0.0
    %310 = vmatpush1.msra.mxu0 0.0
    %311 = vmatprep.subr.mxu0 0.0
    %312 = vmatpush1.msra.mxu0 0.0
    %313 = vmatprep.subr.mxu0 0.0
    %314 = vmatpush1.msra.mxu0 0.0
    %315 = vmatprep.subr.mxu0 0.0
    %316 = vmatpush1.msra.mxu0 0.0
    %317 = vmatprep.subr.mxu0 0.0
    %318 = vmatpush1.msra.mxu0 0.0
    %319 = vmatprep.subr.mxu0 0.0
    %320 = vmatpush1.msra.mxu0 0.0
    %321 = vmatprep.subr.mxu0 0.0
    %322 = vmatpush1.msra.mxu0 0.0
    %323 = vmatprep.subr.mxu0 0.0
    %324 = vmatpush1.msra.mxu0 0.0
    %325 = vmatprep.subr.mxu0 0.0
    %326 = vmatpush1.msra.mxu0 0.0
    %327 = vmatprep.subr.mxu0 0.0
    %328 = vmatpush1.msra.mxu0 0.0
    %329 = vmatprep.subr.mxu0 0.0
    %330 = vmatpush1.msra.mxu0 0.0
    %331 = vmatprep.subr.mxu0 0.0
    %332 = vmatpush1.msra.mxu0 0.0
    %333 = vmatprep.subr.mxu0 0.0
    %334 = vmatpush1.msra.mxu0 0.0
    %335 = vmatprep.subr.mxu0 0.0
    %336 = vmatpush1.msra.mxu0 0.0
    %337 = vmatprep.subr.mxu0 0.0
    %338 = vmatpush1.msra.mxu0 0.0
    %339 = vmatprep.subr.mxu0 0.0
    %340 = vmatpush1.msra.mxu0 0.0
    %341 = vmatprep.subr.mxu0 0.0
    %342 = vmatpush1.msra.mxu0 0.0
    %343 = vmatprep.subr.mxu0 0.0
    %344 = vmatpush1.msra.mxu0 0.0
    %345 = vmatprep.subr.mxu0 0.0
    %346 = vmatpush1.msra.mxu0 0.0
    %347 = vmatprep.subr.mxu0 0.0
    %348 = vmatpush1.msra.mxu0 0.0
    %349 = vmatprep.subr.mxu0 0.0
    %350 = vmatpush1.msra.mxu0 0.0
    %351 = vmatprep.subr.mxu0 0.0
    %352 = vmatpush1.msra.mxu0 0.0
    %353 = vmatprep.subr.mxu0 0.0
    %354 = vmatpush1.msra.mxu0 0.0
    %355 = vmatprep.subr.mxu0 0.0
    %356 = vmatpush1.msra.mxu0 0.0
    %357 = vmatprep.mubr.f32.mxu0 0.0
    %358 = vmatmul.mubr.f32.gmra.mrb[0].mxu0 %v288
    %v359 = vpop.f32.mrb[0].mxu0
    %v360 = vadd.f32 0.0, %v359
    %v361 = vpop.f32.mrb[0].mxu0
    %362 = vmatprep.mubr.f32.mxu0 0.0
    %363 = vmatmul.mubr.f32.gmra.mrb[0].mxu0 %v291
    %v364 = vpop.f32.mrb[0].mxu0
    %v365 = vadd.f32 0.0, %v364
    %v366 = vpop.f32.mrb[0].mxu0
    %367 = vdwg.mxu0
    %v368 = vadd.f32 %v276, %v360
    %v369 = vadd.f32 %v277, %v365
    %370 = vst.msk [vmem:[#allocation3] sm:$0xff] %vm192, %v368
    %371 = vst.msk [vmem:[#allocation3 + $0x8] sm:$0xff] %vm192, %v369
    // Predicated region
    $region62: #{tpu_custom_call.1} parent=1 // pred_check
      %p372 = pneg %p114
    $region63: #{tpu_custom_call.1} parent=1 // pred_check_branch
      %374 = sbr.rel (%p372) target = $region65
    $region64: #{tpu_custom_call.1} parent=1 // pred_region
      %v375 = vld [vmem:[#allocation3] sm:$0xff]
      %v376 = vld [vmem:[#allocation3 + $0x8] sm:$0xff]
      %377 = vst.msk [vmem:[#allocation16] sm:$0xff] %vm192, %v375
      %378 = vst.msk [vmem:[#allocation16 + $0x8] sm:$0xff] %vm192, %v376
    $region65: #{tpu_custom_call.1} parent=1 // pred_fallthru
      _
    // Predicated region
    $region66: #{tpu_custom_call.1} parent=1 // pred_check
      _
    $region67: #{tpu_custom_call.1} parent=1 // pred_check_branch
      %380 = sbr.rel (0) target = $region69
    $region68: #{tpu_custom_call.1} parent=1 // pred_region
      %s382 = ssub.s32 256, 256
      %383 = vsyncadd [#allocation6], %s382
      %s384 = sshll.u32 [#allocation16], 4
      %s385 = int_to_ptr.vmem [resolvable:$true] %s384
      %390 = dma.vmem_to_hbm [thread:$0]  %s385, 256, %s7, [#allocation6], 128, 128, 8
    $region69: #{tpu_custom_call.1} parent=1 // pred_fallthru
      _
    // Predicated region
    $region70: #{tpu_custom_call.1} parent=1 // pred_check
      _
    $region71: #{tpu_custom_call.1} parent=1 // pred_check_branch
      %392 = sbr.rel (0) target = $region73
    $region72: #{tpu_custom_call.1} parent=1 // pred_region
      %393 = dma.done [#allocation6], 256
    $region73: #{tpu_custom_call.1} parent=1 // pred_fallthru
      _
    %394 = vsyncpa [#allocation5], 1
    %395 = vsyncpa [#allocation8], 1
    %396 = vsyncpa [#allocation11], 1
    %397 = vsyncpa [#allocation14], 1
    %398 = vsyncpa [#allocation6], 1

</llo_original>
